<compile_context>
chip_gen: v5e
topology: v5e:2x2
jax: 0.10.0
libtpu: 0.0.40
codegen_flags: <defaults>
</compile_context>

<pallas_src>
import math
import functools

import jax
import jax.numpy as jnp
from jax import lax
from jax.experimental import pallas as pl
from jax.experimental.pallas import tpu as pltpu


def _round_up(x, m):
    return ((x + m - 1) // m) * m


def _pick_tile(dim, cap, align):
    """Pick (tile, padded_extent) for one dim.

    Tiles are `align`-aligned (8/16 sublane, 128 lane) so every block satisfies
    the (8,128) BlockSpec constraint; when the dim does not fit in one tile we
    split into ceil(dim/cap) tiles to keep tiles large while minimizing pad.
    """
    padded_min = _round_up(dim, align)
    if padded_min <= cap:
        return padded_min, padded_min
    n_tiles = -(-dim // cap)
    tile = _round_up(-(-dim // n_tiles), align)
    return tile, _round_up(dim, tile)


def _linear_kernel(*refs, has_bias, acc_in_out):
    """Grid = (M tiles, N tiles, K tiles); K is the innermost reduction axis."""
    if has_bias:
        if acc_in_out:
            x_ref, w_ref, b_ref, o_ref = refs
            acc_ref = o_ref
        else:
            x_ref, w_ref, b_ref, o_ref, acc_ref = refs
    else:
        b_ref = None
        if acc_in_out:
            x_ref, w_ref, o_ref = refs
            acc_ref = o_ref
        else:
            x_ref, w_ref, o_ref, acc_ref = refs

    k = pl.program_id(2)

    @pl.when(k == 0)
    def _init():
        acc_ref[...] = jnp.zeros_like(acc_ref)

    # x: (tm, tk), w: (tn, tk) -- contract both along their last dim so the
    # weight's native (N, K) layout is used directly (no HBM transpose).
    acc_ref[...] += lax.dot_general(
        x_ref[...], w_ref[...],
        dimension_numbers=(((1,), (1,)), ((), ())),
        preferred_element_type=jnp.float32)

    if has_bias or not acc_in_out:
        @pl.when(k == pl.num_programs(2) - 1)
        def _finalize():
            if acc_in_out:
                # f32 output: accumulated in place; just add bias once.
                o_ref[...] = o_ref[...] + b_ref[...].astype(o_ref.dtype)
            else:
                acc = acc_ref[...]
                if has_bias:
                    acc = acc + b_ref[...].astype(jnp.float32)
                o_ref[...] = acc.astype(o_ref.dtype)


def linear_forward(x, weight, bias=None, is_bias=True, compute_dtype=None,
                   tm_cap=512, tn_cap=512, tk_cap=None):
    """y = x @ weight.T (+ bias).  x: (..., K), weight: (N, K), bias: (N,)."""
    orig_shape = x.shape
    K = orig_shape[-1]
    N, K2 = weight.shape
    assert K == K2, "weight must be (out_features, in_features)"

    out_dtype = x.dtype
    x2d = x.reshape(-1, K)
    B = x2d.shape[0]

    # Optional low-precision compute path (bf16 operands, f32 accumulate).
    if compute_dtype is not None:
        if x2d.dtype != compute_dtype:
            x2d = x2d.astype(compute_dtype)
        if weight.dtype != compute_dtype:
            weight = weight.astype(compute_dtype)

    op_itemsize = jnp.dtype(x2d.dtype).itemsize
    out_itemsize = jnp.dtype(out_dtype).itemsize
    if tk_cap is None:
        tk_cap = 512 if op_itemsize >= 4 else 1024
    sub_align = 8 if op_itemsize >= 4 else (16 if op_itemsize == 2 else 32)

    tm, Mp = _pick_tile(B, tm_cap, sub_align)
    tn, Np = _pick_tile(N, tn_cap, 128)
    tk, Kp = _pick_tile(K, tk_cap, 128)

    # Keep >= 2 blocks across the "parallel" axes when it costs no padding,
    # so both v7x TensorCores get work even in the GEMV-like (M-grid = 1) case.
    if Mp // tm == 1 and Np // tn == 1 and N >= 256 and N % 256 == 0:
        tn = _round_up(N // 2, 128)
        Np = _round_up(N, tn)

    grid = (Mp // tm, Np // tn, Kp // tk)

    # Zero-pad to tile boundaries (zeros along K are benign for the reduction;
    # padded M rows / N cols are sliced off at the end).
    x_p = x2d
    if Mp != B or Kp != K:
        x_p = jnp.pad(x2d, ((0, Mp - B), (0, Kp - K)))
    w_p = weight
    if Np != N or Kp != K:
        w_p = jnp.pad(weight, ((0, Np - N), (0, Kp - K)))

    # f32 output => accumulate directly into the VMEM-resident output block.
    acc_in_out = jnp.dtype(out_dtype) == jnp.dtype(jnp.float32)

    def _x_index(i, j, k):
        return (i, k)

    def _w_index(i, j, k):
        return (j, k)

    def _o_index(i, j, k):
        return (i, j)

    # GEMV-like regime: deeper-buffered weight stream hides HBM latency.
    use_buffered = (B <= 64) and (grid[1] * grid[2] >= 3)
    if use_buffered:
        try:
            w_spec = pl.BlockSpec((tn, tk), _w_index,
                                  pipeline_mode=pl.Buffered(3))
        except (TypeError, AttributeError):
            use_buffered = False
            w_spec = pl.BlockSpec((tn, tk), _w_index)
    else:
        w_spec = pl.BlockSpec((tn, tk), _w_index)

    in_specs = [pl.BlockSpec((tm, tk), _x_index), w_spec]
    operands = [x_p, w_p]

    if is_bias:
        assert bias is not None
        b_p = bias.reshape(1, N)
        if Np != N:
            b_p = jnp.pad(b_p, ((0, 0), (0, Np - N)))
        in_specs.append(pl.BlockSpec((1, tn), lambda i, j, k: (0, j)))
        operands.append(b_p)

    scratch_shapes = []
    if not acc_in_out:
        scratch_shapes.append(pltpu.VMEM((tm, tn), jnp.float32))

    # Truthful tiled-re-read traffic estimate for the XLA scheduler.
    cost = pl.CostEstimate(
        flops=2 * B * N * K,
        transcendentals=0,
        bytes_accessed=int(grid[1] * B * K * op_itemsize       # x re-read per N tile
                           + grid[0] * N * K * op_itemsize     # W re-read per M tile
                           + B * N * out_itemsize
                           + (N * jnp.dtype(bias.dtype).itemsize
                              if is_bias else 0)),
    )

    # VMEM plan: double-buffered x / bias / output tiles, 2- or 3-deep weight
    # tiles, plus the f32 accumulator (only when the output is not f32).
    w_bufs = 3 if use_buffered else 2
    footprint = (2 * tm * tk * op_itemsize
                 + w_bufs * tn * tk * op_itemsize
                 + (2 * tn * 4 if is_bias else 0)
                 + 2 * tm * tn * out_itemsize
                 + (0 if acc_in_out else tm * tn * 4))
    try:
        phys_vmem = int(pltpu.get_tpu_info().vmem_capacity_bytes)
    except Exception:
        phys_vmem = 64 * 1024 * 1024   # smallest per-TC VMEM (v7x)
    vmem_limit = int(min(max(2 * footprint, 32 * 1024 * 1024),
                         (phys_vmem * 3) // 4))

    kernel = functools.partial(_linear_kernel, has_bias=bool(is_bias),
                               acc_in_out=acc_in_out)

    out_p = pl.pallas_call(
        kernel,
        out_shape=jax.ShapeDtypeStruct((Mp, Np), out_dtype),
        grid_spec=pltpu.PrefetchScalarGridSpec(
            num_scalar_prefetch=0,
            grid=grid,
            in_specs=in_specs,
            out_specs=pl.BlockSpec((tm, tn), _o_index),
            scratch_shapes=scratch_shapes,
        ),
        compiler_params=pltpu.CompilerParams(
            dimension_semantics=("parallel", "parallel", "arbitrary"),
            vmem_limit_bytes=vmem_limit,
        ),
        cost_estimate=cost,
    )(*operands)

    out = out_p[:B, :N] if (Mp != B or Np != N) else out_p
    return out.reshape(*orig_shape[:-1], N)


def init_linear_params(key, in_features, out_features, is_bias=True,
                       dtype=jnp.float32):
    """Deterministic init matching torch's kaiming_uniform_(a=sqrt(5))."""
    kw, kb = jax.random.split(key)
    bound = 1.0 / math.sqrt(in_features)
    weight = jax.random.uniform(
        kw, (out_features, in_features), dtype, -bound, bound)
    if is_bias:
        bias = jax.random.uniform(kb, (out_features,), dtype, -bound, bound)
    else:
        bias = jnp.zeros((out_features,), dtype)
    return weight, bias


if __name__ == "__main__":
    key = jax.random.PRNGKey(0)
    k_x, k_p = jax.random.split(key)
    hi = jax.lax.Precision.HIGHEST

    # --- small shapes matching the module (batch=8, in=32, out=16) ---
    batch, in_features, out_features = 8, 32, 16
    x = jax.random.normal(k_x, (batch, in_features), jnp.float32)
    weight, bias = init_linear_params(k_p, in_features, out_features, True)

    y = jax.block_until_ready(linear_forward(x, weight, bias, is_bias=True))
    y_ref = jnp.dot(x, weight.T, precision=hi) + bias
    assert y.shape == (batch, out_features)
    assert jnp.allclose(y, y_ref, atol=1e-4, rtol=1e-4)

    y_nb = jax.block_until_ready(linear_forward(x, weight, None, is_bias=False))
    assert jnp.allclose(y_nb, jnp.dot(x, weight.T, precision=hi),
                        atol=1e-4, rtol=1e-4)

    # --- multi-tile f32 path (K/N tiling + VMEM-resident f32 output acc) ---
    B2, K2, N2 = 260, 1536, 1024
    x2 = jax.random.normal(k_x, (B2, K2), jnp.float32)
    w2, b2 = init_linear_params(k_p, K2, N2, True)
    y2 = jax.block_until_ready(linear_forward(x2, w2, b2, is_bias=True))
    ref2 = jnp.dot(x2, w2.T, precision=hi) + b2
    assert jnp.allclose(y2, ref2, atol=2e-3, rtol=2e-3)

    # --- GEMV-like regime: bf16 operands, f32 accumulate, buffered weights ---
    B3, K3, N3 = 4, 2048, 512
    x3 = jax.random.normal(k_x, (B3, K3), jnp.float32).astype(jnp.bfloat16)
    w3, b3 = init_linear_params(k_p, K3, N3, True)
    y3 = jax.block_until_ready(
        linear_forward(x3, w3, b3, is_bias=True, compute_dtype=jnp.bfloat16))
    ref3 = jnp.dot(x3.astype(jnp.float32), w3.T, precision=hi) + b3
    assert jnp.allclose(y3.astype(jnp.float32), ref3, atol=5e-2, rtol=5e-2)

    print("KERNEL_OK")
</pallas_src>

<mosaic_0001>
module attributes {stable_mosaic.version = 11 : i64} {
  func.func @_linear_kernel(%arg0: i32, %arg1: i32, %arg2: i32, %arg3: memref<8x128xf32, #tpu.memory_space<vmem>>, %arg4: memref<128x128xf32, #tpu.memory_space<vmem>>, %arg5: memref<1x128xf32, #tpu.memory_space<vmem>>, %arg6: memref<8x128xf32, #tpu.memory_space<vmem>>) attributes {dimension_semantics = [#tpu.dimension_semantics<parallel>, #tpu.dimension_semantics<parallel>, #tpu.dimension_semantics<arbitrary>], iteration_bounds = array<i64: 1, 1, 1>, scalar_prefetch = 0 : i64, scratch_operands = 0 : i64, tpu.core_type = #tpu.core_type<tc>, window_params = [{transform_indices = @transform_0, window_bounds = array<i64: 8, 128>}, {transform_indices = @transform_1, window_bounds = array<i64: 128, 128>}, {transform_indices = @transform_2, window_bounds = array<i64: 1, 128>}, {transform_indices = @transform_3, window_bounds = array<i64: 8, 128>}]} {
    %c0_i32 = arith.constant 0 : i32
    %0 = arith.cmpi eq, %arg2, %c0_i32 : i32
    %1 = arith.extui %0 : i1 to i32
    %c0_i32_0 = arith.constant 0 : i32
    %2 = arith.cmpi ne, %1, %c0_i32_0 : i32
    scf.if %2 {
      %cst_10 = arith.constant 0.000000e+00 : f32
      %12 = vector.broadcast %cst_10 : f32 to vector<8x128xf32>
      %c0_11 = arith.constant 0 : index
      %c0_12 = arith.constant 0 : index
      %13 = vector.load %arg6[%c0_11, %c0_12] : memref<8x128xf32, #tpu.memory_space<vmem>>, vector<8x128xf32>
      tpu.vector_store %arg6[%c0_11, %c0_12], %12 {strides = array<i32>} : memref<8x128xf32, #tpu.memory_space<vmem>>, vector<8x128xf32>,
    } else {
    }
    %c0 = arith.constant 0 : index
    %c0_1 = arith.constant 0 : index
    %3 = vector.load %arg6[%c0, %c0_1] : memref<8x128xf32, #tpu.memory_space<vmem>>, vector<8x128xf32>
    %c0_2 = arith.constant 0 : index
    %c0_3 = arith.constant 0 : index
    %4 = vector.load %arg3[%c0_2, %c0_3] : memref<8x128xf32, #tpu.memory_space<vmem>>, vector<8x128xf32>
    %c0_4 = arith.constant 0 : index
    %c0_5 = arith.constant 0 : index
    %5 = vector.load %arg4[%c0_4, %c0_5] : memref<128x128xf32, #tpu.memory_space<vmem>>, vector<128x128xf32>
    %cst = arith.constant dense<0.000000e+00> : vector<8x128xf32>
    %6 = tpu.matmul %4, %5, %cst {dimension_numbers = #tpu.dot_dimension_numbers<[1], [1], [0], [0], [0, 0, 1, 0], [], []>} : vector<8x128xf32>, vector<128x128xf32>, vector<8x128xf32> -> vector<8x128xf32>
    %7 = arith.addf %3, %6 : vector<8x128xf32>
    %c0_6 = arith.constant 0 : index
    %c0_7 = arith.constant 0 : index
    %8 = vector.load %arg6[%c0_6, %c0_7] : memref<8x128xf32, #tpu.memory_space<vmem>>, vector<8x128xf32>
    tpu.vector_store %arg6[%c0_6, %c0_7], %7 {strides = array<i32>} : memref<8x128xf32, #tpu.memory_space<vmem>>, vector<8x128xf32>,
    %c0_i32_8 = arith.constant 0 : i32
    %9 = arith.cmpi eq, %arg2, %c0_i32_8 : i32
    %10 = arith.extui %9 : i1 to i32
    %c0_i32_9 = arith.constant 0 : i32
    %11 = arith.cmpi ne, %10, %c0_i32_9 : i32
    scf.if %11 {
      %c0_10 = arith.constant 0 : index
      %c0_11 = arith.constant 0 : index
      %12 = vector.load %arg6[%c0_10, %c0_11] : memref<8x128xf32, #tpu.memory_space<vmem>>, vector<8x128xf32>
      %c0_12 = arith.constant 0 : index
      %c0_13 = arith.constant 0 : index
      %13 = vector.load %arg5[%c0_12, %c0_13] : memref<1x128xf32, #tpu.memory_space<vmem>>, vector<1x128xf32>
      %14 = vector.broadcast %13 : vector<1x128xf32> to vector<8x128xf32>
      %15 = arith.addf %12, %14 : vector<8x128xf32>
      %c0_14 = arith.constant 0 : index
      %c0_15 = arith.constant 0 : index
      %16 = vector.load %arg6[%c0_14, %c0_15] : memref<8x128xf32, #tpu.memory_space<vmem>>, vector<8x128xf32>
      tpu.vector_store %arg6[%c0_14, %c0_15], %15 {strides = array<i32>} : memref<8x128xf32, #tpu.memory_space<vmem>>, vector<8x128xf32>,
    } else {
    }
    return
  }
  func.func @transform_0(%arg0: i32, %arg1: i32, %arg2: i32) -> (i32, i32) {
    %c0_i32 = arith.constant 0 : i32
    return %arg0, %arg2 : i32, i32
  }
  func.func @transform_1(%arg0: i32, %arg1: i32, %arg2: i32) -> (i32, i32) {
    %c0_i32 = arith.constant 0 : i32
    return %arg1, %arg2 : i32, i32
  }
  func.func @transform_2(%arg0: i32, %arg1: i32, %arg2: i32) -> (i32, i32) {
    %c0_i32 = arith.constant 0 : i32
    %c0_i32_0 = arith.constant 0 : i32
    return %c0_i32, %arg1 : i32, i32
  }
  func.func @transform_3(%arg0: i32, %arg1: i32, %arg2: i32) -> (i32, i32) {
    %c0_i32 = arith.constant 0 : i32
    return %arg0, %arg1 : i32, i32
  }
}

</mosaic_0001>

<llo_original>
// kernel: tpu_custom_call.1
$region0: #{tpu_custom_call.1}
  #allocation0 [shape = 'u32[]', space=smem, size = 0x4, offset = 0x4, fixed_abs, tag = 'smem constant byte address 0x4 - core index']
  #allocation1 [shape = 'u32[72,128]{1,0:T(1,128)}', space=vmem, size = 0x9000, scoped, tag = 'internal scratch']
  %s0 = inlined_call_operand.hbm [shape: f32[8,128], index: 0, kind: input, shape index: {}]
  %s1 = inlined_call_operand.hbm [shape: f32[128,128], index: 1, kind: input, shape index: {}]
  %s2 = inlined_call_operand.vmem [shape: f32[1,128], index: 2, kind: input, shape index: {}]
  %s3 = inlined_call_operand.hbm [shape: f32[8,128], index: 3, kind: output, shape index: {}]
  %s4 = sld [smem:[#allocation0]]
  $region38: #{tpu_custom_call.1} parent=0
    _
  %s6 = ssub.s32 1, %s4
  %s7 = scalar_select 0, %s6, %s4
  $region1: #{tpu_custom_call.1} parent=0
    #allocation2 [shape = 'u8[4096]{0}', space=vmem, size = 0x1000, scoped, tag = 'input window, operand 0, single buffered']
    #allocation3 [shape = 's32[1]{0}', space=sflag, size = 0x4, scoped, tag = 'scoped memory for tpu_custom_call.1']
    #allocation4 [shape = 's32[1]{0}', space=sflag, size = 0x4, scoped, tag = 'scoped memory for tpu_custom_call.1']
    #allocation5 [shape = 'u8[65536]{0}', space=vmem, size = 0x10000, scoped, tag = 'input window, operand 1, single buffered']
    #allocation6 [shape = 's32[1]{0}', space=sflag, size = 0x4, scoped, tag = 'scoped memory for tpu_custom_call.1']
    #allocation7 [shape = 'u8[4096]{0}', space=vmem, size = 0x1000, scoped, tag = 'output window, operand 0, single buffered']
    %8 = vsyncpa [#allocation3], 0
    %9 = vsyncpa [#allocation6], 0
    %10 = vsyncpa [#allocation4], 0
    // Predicated region
    $region2: #{tpu_custom_call.1} parent=1 // pred_check
      _
    $region3: #{tpu_custom_call.1} parent=1 // pred_check_branch
      %12 = sbr.rel (0) target = $region5
    $region4: #{tpu_custom_call.1} parent=1 // pred_region
      %14 = vsyncadd [#allocation3], 0
      %s16 = sshll.u32 %s0, 4
      %s17 = int_to_ptr.hbm [resolvable:$true] %s16
      %s18 = sshll.u32 [#allocation2], 4
      %s19 = int_to_ptr.vmem [resolvable:$true] %s18
      %21 = dma.hbm_to_vmem [thread:$0]  %s17, 128, %s19, [#allocation3]
    $region5: #{tpu_custom_call.1} parent=1 // pred_fallthru
      _
    // Predicated region
    $region6: #{tpu_custom_call.1} parent=1 // pred_check
      _
    $region7: #{tpu_custom_call.1} parent=1 // pred_check_branch
      %23 = sbr.rel (0) target = $region9
    $region8: #{tpu_custom_call.1} parent=1 // pred_region
      %25 = vsyncadd [#allocation6], 0
      %s26 = sshll.u32 %s1, 4
      %s27 = int_to_ptr.hbm [resolvable:$true] %s26
      %s28 = sshll.u32 [#allocation5], 4
      %s29 = int_to_ptr.vmem [resolvable:$true] %s28
      %34 = dma.hbm_to_vmem [thread:$0]  %s27, 2048, %s29, [#allocation6], 128, 128, 8
    $region9: #{tpu_custom_call.1} parent=1 // pred_fallthru
      _
    // Predicated region
    $region10: #{tpu_custom_call.1} parent=1 // pred_check
      _
    $region11: #{tpu_custom_call.1} parent=1 // pred_check_branch
      %36 = sbr.rel (0) target = $region13
    $region12: #{tpu_custom_call.1} parent=1 // pred_region
      _
    $region13: #{tpu_custom_call.1} parent=1 // pred_fallthru
      _
    // Predicated region
    $region14: #{tpu_custom_call.1} parent=1 // pred_check
      _
    $region15: #{tpu_custom_call.1} parent=1 // pred_check_branch
      %38 = sbr.rel (0) target = $region17
    $region16: #{tpu_custom_call.1} parent=1 // pred_region
      %40 = dma.done [#allocation3], 128
    $region17: #{tpu_custom_call.1} parent=1 // pred_fallthru
      _
    // Predicated region
    $region18: #{tpu_custom_call.1} parent=1 // pred_check
      _
    $region19: #{tpu_custom_call.1} parent=1 // pred_check_branch
      %42 = sbr.rel (0) target = $region21
    $region20: #{tpu_custom_call.1} parent=1 // pred_region
      %44 = dma.done [#allocation6], 2048
    $region21: #{tpu_custom_call.1} parent=1 // pred_fallthru
      _
    %p45 = scmp.eq.s32.totalorder 0, 0
    // Predicated region
    $region22: #{tpu_custom_call.1} parent=1 // pred_check
      %p46 = pneg %p45
    $region23: #{tpu_custom_call.1} parent=1 // pred_check_branch
      %48 = sbr.rel (%p46) target = $region25
    $region24: #{tpu_custom_call.1} parent=1 // pred_region
      %49 = vst [vmem:[#allocation7] sm:$0xff] 0.0
    $region25: #{tpu_custom_call.1} parent=1 // pred_fallthru
      _
    %v50 = vld [vmem:[#allocation7] sm:$0xff]
    %v51 = vld [vmem:[#allocation2] sm:$0xff]
    %v52 = vld [vmem:[#allocation5] sm:$0xff]
    %v53 = vld [vmem:[#allocation5 + $0x8] sm:$0xff]
    %v54 = vld [vmem:[#allocation5 + $0x10] sm:$0xff]
    %v55 = vld [vmem:[#allocation5 + $0x18] sm:$0xff]
    %v56 = vld [vmem:[#allocation5 + $0x20] sm:$0xff]
    %v57 = vld [vmem:[#allocation5 + $0x28] sm:$0xff]
    %v58 = vld [vmem:[#allocation5 + $0x30] sm:$0xff]
    %v59 = vld [vmem:[#allocation5 + $0x38] sm:$0xff]
    %v60 = vld [vmem:[#allocation5 + $0x40] sm:$0xff]
    %v61 = vld [vmem:[#allocation5 + $0x48] sm:$0xff]
    %v62 = vld [vmem:[#allocation5 + $0x50] sm:$0xff]
    %v63 = vld [vmem:[#allocation5 + $0x58] sm:$0xff]
    %v64 = vld [vmem:[#allocation5 + $0x60] sm:$0xff]
    %v65 = vld [vmem:[#allocation5 + $0x68] sm:$0xff]
    %v66 = vld [vmem:[#allocation5 + $0x70] sm:$0xff]
    %v67 = vld [vmem:[#allocation5 + $0x78] sm:$0xff]
    %68 = vmatpush.xpose.msra.mxu0 %v67
    %69 = vmatpush.xpose.msra.mxu0 %v66
    %70 = vmatpush.xpose.msra.mxu0 %v65
    %71 = vmatpush.xpose.msra.mxu0 %v64
    %72 = vmatpush.xpose.msra.mxu0 %v63
    %73 = vmatpush.xpose.msra.mxu0 %v62
    %74 = vmatpush.xpose.msra.mxu0 %v61
    %75 = vmatpush.xpose.msra.mxu0 %v60
    %76 = vmatpush.xpose.msra.mxu0 %v59
    %77 = vmatpush.xpose.msra.mxu0 %v58
    %78 = vmatpush.xpose.msra.mxu0 %v57
    %79 = vmatpush.xpose.msra.mxu0 %v56
    %80 = vmatpush.xpose.msra.mxu0 %v55
    %81 = vmatpush.xpose.msra.mxu0 %v54
    %82 = vmatpush.xpose.msra.mxu0 %v53
    %83 = vmatpush.xpose.msra.mxu0 %v52
    %84 = vmatmul.f32.gmra.mxu0 %v51
    %v85 = vpop.f32.mrf.mxu0
    %v86 = vadd.f32 0.0, %v85
    %87 = vdwg.mxu0
    %v88 = vadd.f32 %v50, %v86
    %89 = vst [vmem:[#allocation7] sm:$0xff] %v88
    // Predicated region
    $region26: #{tpu_custom_call.1} parent=1 // pred_check
      %p90 = pneg %p45
    $region27: #{tpu_custom_call.1} parent=1 // pred_check_branch
      %92 = sbr.rel (%p90) target = $region29
    $region28: #{tpu_custom_call.1} parent=1 // pred_region
      %v93 = vld [vmem:[#allocation7] sm:$0xff]
      %v94 = vld [vmem:[%s2] sm:$0x1]
      %v96 = vperm.slane %v94, 0
      %v98 = vadd.f32 %v93, %v96
      %99 = vst [vmem:[#allocation7] sm:$0xff] %v98
    $region29: #{tpu_custom_call.1} parent=1 // pred_fallthru
      _
    // Predicated region
    $region30: #{tpu_custom_call.1} parent=1 // pred_check
      _
    $region31: #{tpu_custom_call.1} parent=1 // pred_check_branch
      %101 = sbr.rel (0) target = $region33
    $region32: #{tpu_custom_call.1} parent=1 // pred_region
      %103 = vsyncadd [#allocation4], 0
      %s105 = sshll.u32 [#allocation7], 4
      %s106 = int_to_ptr.vmem [resolvable:$true] %s105
      %s107 = sshll.u32 %s3, 4
      %s108 = int_to_ptr.hbm [resolvable:$true] %s107
      %110 = dma.vmem_to_hbm [thread:$0]  %s106, 128, %s108, [#allocation4]
    $region33: #{tpu_custom_call.1} parent=1 // pred_fallthru
      _
    // Predicated region
    $region34: #{tpu_custom_call.1} parent=1 // pred_check
      _
    $region35: #{tpu_custom_call.1} parent=1 // pred_check_branch
      %112 = sbr.rel (0) target = $region37
    $region36: #{tpu_custom_call.1} parent=1 // pred_region
      %114 = dma.done [#allocation4], 128
    $region37: #{tpu_custom_call.1} parent=1 // pred_fallthru
      _
    %115 = vsyncpa [#allocation3], 1
    %116 = vsyncpa [#allocation6], 1
    %117 = vsyncpa [#allocation4], 1

</llo_original>
